<compile_context>
chip_gen: v7x
topology: tpu7x:2x2x1
jax: 0.10.0
libtpu: 0.0.40
codegen_flags: <defaults>
</compile_context>

<pallas_src>
import jax
import jax.numpy as jnp
from jax.experimental import pallas as pl
from jax.experimental.pallas import tpu as pltpu


def _round_up(x, m):
    return (x + m - 1) // m * m


def _sublane(dtype):
    # Minimum second-to-last block-dim multiple for the dtype.
    itemsize = jnp.dtype(dtype).itemsize
    return {4: 8, 2: 16, 1: 32}.get(itemsize, 8)


def _pick_contract_tile(dim, cap):
    """Largest multiple-of-128 divisor of `dim` that is <= cap, else full dim.

    A ragged K block would feed undefined data into the accumulator, so the
    tile must divide the dimension exactly; any dim that is small or not
    128-aligned is kept as one full-extent block (legal for any size).
    """
    if dim <= cap or dim % 128 != 0:
        return dim
    t = max(cap - (cap % 128), 128)
    while dim % t != 0:
        t -= 128
    return t


def _linear_kernel_direct(x_ref, wt_ref, b_ref, o_ref):
    # x_ref: (TM, D)  wt_ref: (D, O)  b_ref: (1, O) f32  o_ref: (TM, O)
    acc = jnp.dot(x_ref[...], wt_ref[...], preferred_element_type=jnp.float32)
    o_ref[...] = (acc + b_ref[...]).astype(o_ref.dtype)


def _linear_kernel_acc(x_ref, wt_ref, b_ref, o_ref, acc_ref):
    # K-tiled variant: f32 accumulator scratch, init at k==0, write at k==last.
    k = pl.program_id(2)

    @pl.when(k == 0)
    def _():
        acc_ref[...] = jnp.zeros_like(acc_ref)

    acc_ref[...] += jnp.dot(x_ref[...], wt_ref[...],
                            preferred_element_type=jnp.float32)

    @pl.when(k == pl.num_programs(2) - 1)
    def _():
        o_ref[...] = (acc_ref[...] + b_ref[...]).astype(o_ref.dtype)


def _pallas_linear(x2d, w, b, *, tm=1024, tk=512, tn=512, compute_dtype=None):
    """y = x2d @ w.T + b with w in PyTorch nn.Linear (O, D) layout."""
    M, D = x2d.shape
    O = w.shape[0]
    out_dtype = x2d.dtype

    if compute_dtype is not None:
        # bf16 operand path (v6e/v7x): halves streamed HBM bytes and uses the
        # bf16 MXU path.  Accumulation / bias add stay f32.
        x2d = x2d.astype(compute_dtype)
        w = w.astype(compute_dtype)
    in_dtype = x2d.dtype
    in_bytes = jnp.dtype(in_dtype).itemsize
    out_bytes = jnp.dtype(out_dtype).itemsize

    # W is loop-invariant: transpose it ONCE here (outside the grid loop) so
    # the kernel is a plain (TM,TK)@(TK,TN) contraction and Mosaic never has
    # to re-transpose the weight tile on the XLU every grid step.
    wt = jnp.transpose(w)                      # (D, O)
    b2 = b.astype(jnp.float32).reshape(1, O)   # exact f32 bias add

    # ---- tile selection -----------------------------------------------------
    TK = _pick_contract_tile(D, tk)
    TN = _pick_contract_tile(O, tn)
    nk = D // TK                               # exact by construction
    nn = pl.cdiv(O, TN)

    sub = max(_sublane(in_dtype), _sublane(out_dtype))
    budget = 16 * 1024 * 1024                  # keep block buffers << 32 MiB scoped
    per_row = 2 * (TK * in_bytes + TN * out_bytes) + TN * 4
    TM = min(tm, max(sub, budget // max(per_row, 1)))
    # Keep >= ~4 grid steps along M when M allows so the "parallel" M axis can
    # be sharded across v7x's two TensorCores (no effect on v5e/v6e).
    TM = min(TM, max(sub, _round_up(pl.cdiv(M, 4), sub)))
    TM = _round_up(TM, sub)
    if TM >= M:
        TM = M                                 # one full-extent block (always legal)
    nm = pl.cdiv(M, TM)

    k_tiled = nk > 1
    kernel = _linear_kernel_acc if k_tiled else _linear_kernel_direct
    scratch = [pltpu.VMEM((TM, TN), jnp.float32)] if k_tiled else []

    x_spec = pl.BlockSpec((TM, TK), lambda i, j, k: (i, k))
    o_spec = pl.BlockSpec((TM, TN), lambda i, j, k: (i, j))
    if nn == 1 and nk == 1:
        # Loop-invariant operands: single buffer, fetched once; the saved VMEM
        # goes straight into a larger TM.
        wt_spec = pl.BlockSpec((TK, TN), lambda i, j, k: (0, 0),
                               pipeline_mode=pl.Buffered(1))
        b_spec = pl.BlockSpec((1, TN), lambda i, j, k: (0, 0),
                              pipeline_mode=pl.Buffered(1))
        w_bufs = 1
    else:
        wt_spec = pl.BlockSpec((TK, TN), lambda i, j, k: (k, j))
        b_spec = pl.BlockSpec((1, TN), lambda i, j, k: (0, j))
        w_bufs = 2

    block_bytes = (2 * TM * TK * in_bytes            # x (double-buffered)
                   + 2 * TM * TN * out_bytes         # out (double-buffered)
                   + w_bufs * TK * TN * in_bytes     # weight
                   + w_bufs * TN * 4                 # bias
                   + (TM * TN * 4 if k_tiled else 0))
    vmem_limit = int(min(max(2 * block_bytes, 16 * 1024 * 1024),
                         48 * 1024 * 1024))

    cost = pl.CostEstimate(
        flops=2 * M * D * O,
        transcendentals=0,
        bytes_accessed=(M * D * in_bytes + D * O * in_bytes + O * 4
                        + M * O * out_bytes),
    )

    # TODO(synk): if profiling shows exposed DMA at small TM, sweep
    # pipeline_mode=pl.Buffered(3) on x_spec.
    return pl.pallas_call(
        kernel,
        out_shape=jax.ShapeDtypeStruct((M, O), out_dtype),
        grid_spec=pltpu.PrefetchScalarGridSpec(
            num_scalar_prefetch=0,
            grid=(nm, nn, nk),
            in_specs=[x_spec, wt_spec, b_spec],
            out_specs=o_spec,
            scratch_shapes=scratch,
        ),
        compiler_params=pltpu.CompilerParams(
            dimension_semantics=("parallel", "parallel", "arbitrary"),
            vmem_limit_bytes=vmem_limit,
        ),
        cost_estimate=cost,
    )(x2d, wt, b2)


def time_distributed_linear(x, w, b, *, tm=1024, tk=512, tn=512,
                            compute_dtype=None):
    """Reproduces TimeDistributed(nn.Linear(D, O)).forward(x)."""
    if x.ndim <= 2:
        x2d = x if x.ndim == 2 else x.reshape(1, -1)
        y = _pallas_linear(x2d, w, b, tm=tm, tk=tk, tn=tn,
                           compute_dtype=compute_dtype)
        return y if x.ndim == 2 else y.reshape(-1)
    n, t, d = x.shape
    x_reshape = x.reshape(n * t, d)            # == contiguous().view(t*n, d)
    y = _pallas_linear(x_reshape, w, b, tm=tm, tk=tk, tn=tn,
                       compute_dtype=compute_dtype)
    return y.reshape(n, t, y.shape[1])         # == view(n, t, O)


def _reference(x3d, w, b):
    n, t, d = x3d.shape
    y = jnp.dot(x3d.reshape(n * t, d), w.T,
                precision=jax.lax.Precision.HIGHEST) + b
    return y.reshape(n, t, w.shape[0])


if __name__ == "__main__":
    key = jax.random.PRNGKey(0)
    kx, kw, kb, kx2, kx3 = jax.random.split(key, 5)

    # --- Test 1: shapes implied by the module (batch=2, time=8, features=32,
    #             wrapped Linear out_features=32). -----------------------------
    n, t, d, o = 2, 8, 32, 32
    x = jax.random.normal(kx, (n, t, d), dtype=jnp.float32)
    w = jax.random.normal(kw, (o, d), dtype=jnp.float32) * 0.1
    b = jax.random.normal(kb, (o,), dtype=jnp.float32) * 0.1

    y = jax.block_until_ready(time_distributed_linear(x, w, b))
    ref = _reference(x, w, b)
    assert y.shape == (n, t, o)
    assert jnp.allclose(y, ref, atol=2e-2, rtol=2e-2)

    # 2-D fallback path (len(x.size()) <= 2 branch).
    y2d = jax.block_until_ready(time_distributed_linear(x[:, 0, :], w, b))
    ref2d = jnp.dot(x[:, 0, :], w.T, precision=jax.lax.Precision.HIGHEST) + b
    assert jnp.allclose(y2d, ref2d, atol=2e-2, rtol=2e-2)

    # --- Test 2: ragged M, non-128 D/O, multi-step M grid (unpadded x/y). -----
    n2, t2, d2, o2 = 3, 100, 48, 96            # M = 300
    x2 = jax.random.normal(kx2, (n2, t2, d2), dtype=jnp.float32)
    w2 = jax.random.normal(kw, (o2, d2), dtype=jnp.float32) * 0.1
    b2 = jax.random.normal(kb, (o2,), dtype=jnp.float32) * 0.1
    y2 = jax.block_until_ready(time_distributed_linear(x2, w2, b2, tm=128))
    ref2 = _reference(x2, w2, b2)
    assert y2.shape == (n2, t2, o2)
    assert jnp.allclose(y2, ref2, atol=2e-2, rtol=2e-2)

    # --- Test 3: K/N-tiled path (f32 VMEM accumulator) for a larger Linear. ---
    n3, t3, d3, o3 = 2, 100, 256, 256          # M = 200, grid (4, 2, 2)
    x3 = jax.random.normal(kx3, (n3, t3, d3), dtype=jnp.float32)
    w3 = jax.random.normal(kw, (o3, d3), dtype=jnp.float32) * 0.05
    b3 = jax.random.normal(kb, (o3,), dtype=jnp.float32) * 0.05
    y3 = jax.block_until_ready(
        time_distributed_linear(x3, w3, b3, tm=64, tk=128, tn=128))
    ref3 = _reference(x3, w3, b3)
    assert y3.shape == (n3, t3, o3)
    assert jnp.allclose(y3, ref3, atol=2e-2, rtol=2e-2)

    # --- Test 4: bf16 operand path (f32 accumulation), loose tolerance. -------
    y4 = jax.block_until_ready(
        time_distributed_linear(x2, w2, b2, compute_dtype=jnp.bfloat16))
    assert jnp.allclose(y4, ref2, atol=1e-1, rtol=1e-1)

    print("KERNEL_OK")
</pallas_src>

<mosaic_0001>
module attributes {stable_mosaic.version = 11 : i64} {
  func.func @_linear_kernel_direct(%arg0: i32, %arg1: i32, %arg2: i32, %arg3: memref<8x32xf32, #tpu.memory_space<vmem>>, %arg4: memref<32x32xf32, #tpu.memory_space<vmem>>, %arg5: memref<1x32xf32, #tpu.memory_space<vmem>>, %arg6: memref<8x32xf32, #tpu.memory_space<vmem>>) attributes {dimension_semantics = [#tpu.dimension_semantics<parallel>, #tpu.dimension_semantics<parallel>, #tpu.dimension_semantics<arbitrary>], iteration_bounds = array<i64: 2, 1, 1>, scalar_prefetch = 0 : i64, scratch_operands = 0 : i64, tpu.core_type = #tpu.core_type<tc>, window_params = [{transform_indices = @transform_0, window_bounds = array<i64: 8, 32>}, {pipeline_mode = #tpu.pipeline_mode<synchronous>, transform_indices = @transform_1, window_bounds = array<i64: 32, 32>}, {pipeline_mode = #tpu.pipeline_mode<synchronous>, transform_indices = @transform_2, window_bounds = array<i64: 1, 32>}, {transform_indices = @transform_3, window_bounds = array<i64: 8, 32>}]} {
    %c0 = arith.constant 0 : index
    %c0_0 = arith.constant 0 : index
    %0 = vector.load %arg3[%c0, %c0_0] : memref<8x32xf32, #tpu.memory_space<vmem>>, vector<8x32xf32>
    %c0_1 = arith.constant 0 : index
    %c0_2 = arith.constant 0 : index
    %1 = vector.load %arg4[%c0_1, %c0_2] : memref<32x32xf32, #tpu.memory_space<vmem>>, vector<32x32xf32>
    %cst = arith.constant dense<0.000000e+00> : vector<8x32xf32>
    %2 = tpu.matmul %0, %1, %cst {dimension_numbers = #tpu.dot_dimension_numbers<[1], [0], [0], [1], [0, 0, 1, 1], [], []>} : vector<8x32xf32>, vector<32x32xf32>, vector<8x32xf32> -> vector<8x32xf32>
    %c0_3 = arith.constant 0 : index
    %c0_4 = arith.constant 0 : index
    %3 = vector.load %arg5[%c0_3, %c0_4] : memref<1x32xf32, #tpu.memory_space<vmem>>, vector<1x32xf32>
    %4 = vector.broadcast %3 : vector<1x32xf32> to vector<8x32xf32>
    %5 = arith.addf %2, %4 : vector<8x32xf32>
    %c0_5 = arith.constant 0 : index
    %c0_6 = arith.constant 0 : index
    %6 = vector.load %arg6[%c0_5, %c0_6] : memref<8x32xf32, #tpu.memory_space<vmem>>, vector<8x32xf32>
    tpu.vector_store %arg6[%c0_5, %c0_6], %5 {strides = array<i32>} : memref<8x32xf32, #tpu.memory_space<vmem>>, vector<8x32xf32>,
    return
  }
  func.func @transform_0(%arg0: i32, %arg1: i32, %arg2: i32) -> (i32, i32) {
    %c0_i32 = arith.constant 0 : i32
    return %arg0, %arg2 : i32, i32
  }
  func.func @transform_1(%arg0: i32, %arg1: i32, %arg2: i32) -> (i32, i32) {
    %c0_i32 = arith.constant 0 : i32
    %c0_i32_0 = arith.constant 0 : i32
    %c0_i32_1 = arith.constant 0 : i32
    return %c0_i32, %c0_i32_0 : i32, i32
  }
  func.func @transform_2(%arg0: i32, %arg1: i32, %arg2: i32) -> (i32, i32) {
    %c0_i32 = arith.constant 0 : i32
    %c0_i32_0 = arith.constant 0 : i32
    %c0_i32_1 = arith.constant 0 : i32
    return %c0_i32, %c0_i32_0 : i32, i32
  }
  func.func @transform_3(%arg0: i32, %arg1: i32, %arg2: i32) -> (i32, i32) {
    %c0_i32 = arith.constant 0 : i32
    return %arg0, %arg1 : i32, i32
  }
}

</mosaic_0001>

<llo_original>
// kernel: tpu_custom_call.1
$region0: #{tpu_custom_call.1}
  #allocation0 [shape = 'u32[]', space=smem, size = 0x4, offset = 0x4, fixed_abs, tag = 'smem constant byte address 0x4 - core index']
  #allocation1 [shape = 'u32[144,128]{1,0:T(1,128)}', space=vmem, size = 0x12000, scoped, tag = 'internal scratch']
  %s0 = inlined_call_operand.hbm [shape: f32[16,32], index: 0, kind: input, shape index: {}]
  %s1 = inlined_call_operand.hbm [shape: f32[32,32], index: 1, kind: input, shape index: {}]
  %s2 = inlined_call_operand.vmem [shape: f32[1,32], index: 2, kind: input, shape index: {}]
  %s3 = inlined_call_operand.hbm [shape: f32[16,32], index: 3, kind: output, shape index: {}]
  %s4 = sld [smem:[#allocation0]]
  $region53: #{tpu_custom_call.1} parent=0
    _
  %s6 = ssub.s32 1, %s4
  %s7 = scalar_select 0, %s6, %s4
  $region1: #{tpu_custom_call.1} parent=0
    #allocation2 [shape = 'u8[8192]{0}', space=vmem, size = 0x2000, scoped, tag = 'input window, operand 0']
    #allocation3 [shape = 's32[2]{0}', space=sflag, size = 0x8, scoped, tag = 'scoped memory for tpu_custom_call.1']
    #allocation4 [shape = 's32[2]{0}', space=sflag, size = 0x8, scoped, tag = 'scoped memory for tpu_custom_call.1']
    #allocation5 [shape = 'u8[16384]{0}', space=vmem, size = 0x4000, scoped, tag = 'input window, operand 1, single buffered']
    #allocation6 [shape = 's32[1]{0}', space=sflag, size = 0x4, scoped, tag = 'scoped memory for tpu_custom_call.1']
    #allocation7 [shape = 'u8[8192]{0}', space=vmem, size = 0x2000, scoped, tag = 'output window, operand 0']
    %8 = vsyncpa [#allocation3], 0
    %s9 = scalar_lea.sflag [#allocation3], 1
    %10 = vsyncpa %s9, 0
    %11 = vsyncpa [#allocation6], 0
    %12 = vsyncpa [#allocation4], 0
    %s13 = scalar_lea.sflag [#allocation4], 1
    %14 = vsyncpa %s13, 0
    loop: start=0, step=1, limit=4
    $region2: #{tpu_custom_call.1} parent=1 // loop_pre_header
      _
    $region3: #{tpu_custom_call.1} parent=1 // loop_header
      %s16 = sphi 0, %s20
      %p17 = scmp.ge.s32.totalorder %s16, 4
      %s23 = sphi 0, %s42
      %s24 = sphi 0, %s38
      %s25 = sphi 0, %s34
      %s26 = sphi 0, %s23
      %s27 = sphi 0, %s24
      %s28 = sphi 0, %s25
      %s29 = sphi 0, %s26
      %s30 = sphi 0, %s27
      %s31 = sphi 0, %s28
      %s47 = sphi 0, %s49
      %s50 = sphi 0, %s47
      %s51 = sphi 0, %s50
      %s67 = sphi 0, %s51
      %s71 = sphi 0, %s71
      %s73 = sphi 0, %s71
      %s74 = sphi 0, %s73
      %s88 = sphi 0, %s74
      %s92 = sphi 0, %s92
      %s94 = sphi 0, %s92
      %s95 = sphi 0, %s94
      %s109 = sphi 0, %s95
      %s117 = sphi 0, %s119
      %s120 = sphi 0, %s117
      %s121 = sphi 0, %s120
      %s137 = sphi 0, %s121
    $region4: #{tpu_custom_call.1} parent=1 // loop_header_branch
      %19 = sbr.rel (%p17) target = $region8
    $region5: #{tpu_custom_call.1} parent=1 // loop_body
      %s21 = ssub.s32 %s16, 1
      %s22 = ssub.s32 %s16, 2
      %s32 = sadd.s32 1, %s25
      %p33 = scmp.ge.s32.totalorder %s32, 1
      %s34 = scalar_select %p33, 0, %s32
      %s35 = sadd.s32 1, %s24
      %s36 = scalar_select %p33, %s35, %s24
      %p37 = scmp.ge.s32.totalorder %s36, 1
      %s38 = scalar_select %p37, 0, %s36
      %s39 = sadd.s32 1, %s23
      %s40 = scalar_select %p37, %s39, %s23
      %p41 = scmp.ge.s32.totalorder %s40, 2
      %s42 = scalar_select %p41, 0, %s40
      %s43 = ssub.s32 %s23, %s42
      %s44 = ssub.s32 %s25, %s34
      %s45 = sor.u32 %s43, %s44
      %p46 = scmp.eq.s32.totalorder %s45, 0
      %s48 = sadd.s32 %s47, 1
      %s49 = scalar_select %p46, %s47, %s48
      %p52 = pneg %p46
      %p53 = scmp.eq.s32.totalorder %s16, 1
      %p54 = por %p52, %p53
      %p55 = scmp.ne.s32.totalorder %s47, %s50
      %p56 = scmp.eq.s32.totalorder %s16, 0
      %p57 = por %p55, %p56
      %p58 = scmp.ne.s32.totalorder %s47, %s50
      %p59 = scmp.eq.s32.totalorder %s21, 1
      %p60 = por %p58, %p59
      %p61 = scmp.ne.s32.totalorder %s50, %s51
      %p62 = scmp.eq.s32.totalorder %s21, 0
      %p63 = por %p61, %p62
      %p64 = scmp.ne.s32.totalorder %s50, %s51
      %p65 = scmp.eq.s32.totalorder %s22, 1
      %p66 = por %p64, %p65
      %p68 = scmp.ne.s32.totalorder %s51, %s67
      %p69 = scmp.eq.s32.totalorder %s22, 0
      %p70 = por %p68, %p69
      %s72 = sadd.s32 %s71, 1
      %p75 = scmp.eq.s32.totalorder %s16, 1
      %p76 = scmp.ne.s32.totalorder %s71, %s73
      %p77 = scmp.eq.s32.totalorder %s16, 0
      %p78 = por %p76, %p77
      %p79 = scmp.ne.s32.totalorder %s71, %s73
      %p80 = scmp.eq.s32.totalorder %s21, 1
      %p81 = por %p79, %p80
      %p82 = scmp.ne.s32.totalorder %s73, %s74
      %p83 = scmp.eq.s32.totalorder %s21, 0
      %p84 = por %p82, %p83
      %p85 = scmp.ne.s32.totalorder %s73, %s74
      %p86 = scmp.eq.s32.totalorder %s22, 1
      %p87 = por %p85, %p86
      %p89 = scmp.ne.s32.totalorder %s74, %s88
      %p90 = scmp.eq.s32.totalorder %s22, 0
      %p91 = por %p89, %p90
      %s93 = sadd.s32 %s92, 1
      %p96 = scmp.eq.s32.totalorder %s16, 1
      %p97 = scmp.ne.s32.totalorder %s92, %s94
      %p98 = scmp.eq.s32.totalorder %s16, 0
      %p99 = por %p97, %p98
      %p100 = scmp.ne.s32.totalorder %s92, %s94
      %p101 = scmp.eq.s32.totalorder %s21, 1
      %p102 = por %p100, %p101
      %p103 = scmp.ne.s32.totalorder %s94, %s95
      %p104 = scmp.eq.s32.totalorder %s21, 0
      %p105 = por %p103, %p104
      %p106 = scmp.ne.s32.totalorder %s94, %s95
      %p107 = scmp.eq.s32.totalorder %s22, 1
      %p108 = por %p106, %p107
      %p110 = scmp.ne.s32.totalorder %s95, %s109
      %p111 = scmp.eq.s32.totalorder %s22, 0
      %p112 = por %p110, %p111
      %s113 = ssub.s32 %s23, %s42
      %s114 = ssub.s32 %s24, %s38
      %s115 = sor.u32 %s113, %s114
      %p116 = scmp.eq.s32.totalorder %s115, 0
      %s118 = sadd.s32 %s117, 1
      %s119 = scalar_select %p116, %s117, %s118
      %p122 = pneg %p116
      %p123 = scmp.eq.s32.totalorder %s16, 1
      %p124 = por %p122, %p123
      %p125 = scmp.ne.s32.totalorder %s117, %s120
      %p126 = scmp.eq.s32.totalorder %s16, 0
      %p127 = por %p125, %p126
      %p128 = scmp.ne.s32.totalorder %s117, %s120
      %p129 = scmp.eq.s32.totalorder %s21, 1
      %p130 = por %p128, %p129
      %p131 = scmp.ne.s32.totalorder %s120, %s121
      %p132 = scmp.eq.s32.totalorder %s21, 0
      %p133 = por %p131, %p132
      %p134 = scmp.ne.s32.totalorder %s120, %s121
      %p135 = scmp.eq.s32.totalorder %s22, 1
      %p136 = por %p134, %p135
      %p138 = scmp.ne.s32.totalorder %s121, %s137
      %p139 = scmp.eq.s32.totalorder %s22, 0
      %p140 = por %p138, %p139
      %p141 = scmp.le.s32.totalorder 1, %s16
      %p142 = scmp.lt.s32.totalorder %s16, 3
      %p143 = pnand %p141, %p142
      %p144 = pneg %p143
      // Predicated region
      $region9: #{tpu_custom_call.1} parent=5 // pred_check
        _
      $region10: #{tpu_custom_call.1} parent=5 // pred_check_branch
        %146 = sbr.rel (%p143) target = $region12
      $region11: #{tpu_custom_call.1} parent=5 // pred_region
        %s147 = ssub.s32 %s16, 1
        // Predicated region
        $region13: #{tpu_custom_call.1} parent=11 // pred_check
          %p148 = pneg %p84
        $region14: #{tpu_custom_call.1} parent=11 // pred_check_branch
          %150 = sbr.rel (%p148) target = $region16
        $region15: #{tpu_custom_call.1} parent=11 // pred_region
          %s152 = ssub.s32 512, 512
          %153 = vsyncadd [#allocation6], %s152
          %s154 = sshll.u32 [#allocation5], 4
          %s155 = int_to_ptr.vmem [resolvable:$true] %s154
          %160 = dma.hbm_to_vmem [thread:$0]  %s1, 512, %s155, [#allocation6], 128, 128, 8
        $region16: #{tpu_custom_call.1} parent=11 // pred_fallthru
          _
        // Predicated region
        $region17: #{tpu_custom_call.1} parent=11 // pred_check
          %p161 = pneg %p105
        $region18: #{tpu_custom_call.1} parent=11 // pred_check_branch
          %163 = sbr.rel (%p161) target = $region20
        $region19: #{tpu_custom_call.1} parent=11 // pred_region
          _
        $region20: #{tpu_custom_call.1} parent=11 // pred_fallthru
          _
      $region12: #{tpu_custom_call.1} parent=5 // pred_fallthru
        _
      %p164 = scmp.lt.s32.totalorder %s16, 2
      // Predicated region
      $region21: #{tpu_custom_call.1} parent=5 // pred_check
        %p165 = pneg %p164
      $region22: #{tpu_custom_call.1} parent=5 // pred_check_branch
        %167 = sbr.rel (%p165) target = $region24
      $region23: #{tpu_custom_call.1} parent=5 // pred_region
        // Predicated region
        $region25: #{tpu_custom_call.1} parent=23 // pred_check
          %p168 = pneg %p57
        $region26: #{tpu_custom_call.1} parent=23 // pred_check_branch
          %170 = sbr.rel (%p168) target = $region28
        $region27: #{tpu_custom_call.1} parent=23 // pred_region
          %s171 = sand.u32 %s47, 1
          %s172 = scalar_lea.sflag [#allocation3], %s171
          %s173 = sand.u32 %s47, 1
          %s174 = smul.addr %s173, 8
          %s175 = scalar_lea.vmem [#allocation2], %s174
          %s177 = ssub.s32 128, 128
          %178 = vsyncadd %s172, %s177
          %s179 = sadd.s32 %s25, %s23
          %s180 = smul.addr %s179, 128
          %s181 = scalar_lea.hbm %s0, %s180
          %s183 = sshll.u32 %s175, 4
          %s184 = int_to_ptr.vmem [resolvable:$true] %s183
          %186 = dma.hbm_to_vmem [thread:$0]  %s181, 128, %s184, %s172
        $region28: #{tpu_custom_call.1} parent=23 // pred_fallthru
          _
      $region24: #{tpu_custom_call.1} parent=5 // pred_fallthru
        _
      %p187 = scmp.le.s32.totalorder 1, %s16
      %p188 = scmp.lt.s32.totalorder %s16, 3
      %p189 = pnand %p187, %p188
      %p190 = pneg %p189
      // Predicated region
      $region29: #{tpu_custom_call.1} parent=5 // pred_check
        _
      $region30: #{tpu_custom_call.1} parent=5 // pred_check_branch
        %192 = sbr.rel (%p189) target = $region32
      $region31: #{tpu_custom_call.1} parent=5 // pred_region
        %s193 = ssub.s32 %s16, 1
        %s194 = sand.u32 %s50, 1
        %s195 = scalar_lea.sflag [#allocation3], %s194
        %s196 = sand.u32 %s50, 1
        %s197 = smul.addr %s196, 8
        %s198 = scalar_lea.vmem [#allocation2], %s197
        // Predicated region
        $region33: #{tpu_custom_call.1} parent=31 // pred_check
          %p199 = pneg %p63
        $region34: #{tpu_custom_call.1} parent=31 // pred_check_branch
          %201 = sbr.rel (%p199) target = $region36
        $region35: #{tpu_custom_call.1} parent=31 // pred_region
          %202 = dma.done %s195, 128
        $region36: #{tpu_custom_call.1} parent=31 // pred_fallthru
          _
        // Predicated region
        $region37: #{tpu_custom_call.1} parent=31 // pred_check
          %p203 = pneg %p84
        $region38: #{tpu_custom_call.1} parent=31 // pred_check_branch
          %205 = sbr.rel (%p203) target = $region40
        $region39: #{tpu_custom_call.1} parent=31 // pred_region
          %206 = dma.done [#allocation6], 512
        $region40: #{tpu_custom_call.1} parent=31 // pred_fallthru
          _
        %s207 = sand.u32 %s50, 1
        %s208 = scalar_lea.sflag [#allocation3], %s207
        %s209 = sand.u32 %s50, 1
        %s210 = smul.addr %s209, 8
        %s211 = scalar_lea.vmem [#allocation2], %s210
        %p212 = pneg %p63
        %p213 = pneg %p60
        %p214 = pneg %p84
        %p215 = pneg %p81
        %p216 = pneg %p105
        %p217 = pneg %p102
        %p218 = pneg %p133
        %p219 = pneg %p130
        %s220 = sand.u32 %s120, 1
        %s221 = scalar_lea.sflag [#allocation4], %s220
        %s222 = sand.u32 %s120, 1
        %s223 = smul.addr %s222, 8
        %s224 = scalar_lea.vmem [#allocation7], %s223
        %v225 = vld [vmem:[%s198] sm:$0xff]
        %v226 = vld [vmem:[#allocation5] sm:$0xff]
        %v227 = vld [vmem:[#allocation5 + $0x8] sm:$0xff]
        %v228 = vld [vmem:[#allocation5 + $0x10] sm:$0xff]
        %v229 = vld [vmem:[#allocation5 + $0x18] sm:$0xff]
        %v230 = vld [vmem:[%s2] sm:$0x1]
        %v232 = vlaneseq
        %v233 = vshrl.u32 %v232, 7
        %v234 = vsub.s32 0, %v233
        %v235 = vrot.slane %v230, %v234
        %vm237 = vcmask 261120
        %v239 = vsel %vm237, %v225, 0
        %241 = vmatprep.subr.mxu0 0.0
        %242 = vmatpush1.msra.mxu0 %v226
        %243 = vmatprep.subr.mxu0 0.0
        %244 = vmatpush1.msra.mxu0 %v227
        %245 = vmatprep.subr.mxu0 0.0
        %246 = vmatpush1.msra.mxu0 %v228
        %247 = vmatprep.subr.mxu0 0.0
        %248 = vmatpush1.msra.mxu0 %v229
        %249 = vmatprep.subr.mxu0 0.0
        %250 = vmatpush1.msra.mxu0 0.0
        %251 = vmatprep.subr.mxu0 0.0
        %252 = vmatpush1.msra.mxu0 0.0
        %253 = vmatprep.subr.mxu0 0.0
        %254 = vmatpush1.msra.mxu0 0.0
        %255 = vmatprep.subr.mxu0 0.0
        %256 = vmatpush1.msra.mxu0 0.0
        %257 = vmatprep.subr.mxu0 0.0
        %258 = vmatpush1.msra.mxu0 0.0
        %259 = vmatprep.subr.mxu0 0.0
        %260 = vmatpush1.msra.mxu0 0.0
        %261 = vmatprep.subr.mxu0 0.0
        %262 = vmatpush1.msra.mxu0 0.0
        %263 = vmatprep.subr.mxu0 0.0
        %264 = vmatpush1.msra.mxu0 0.0
        %265 = vmatprep.subr.mxu0 0.0
        %266 = vmatpush1.msra.mxu0 0.0
        %267 = vmatprep.subr.mxu0 0.0
        %268 = vmatpush1.msra.mxu0 0.0
        %269 = vmatprep.subr.mxu0 0.0
        %270 = vmatpush1.msra.mxu0 0.0
        %271 = vmatprep.subr.mxu0 0.0
        %272 = vmatpush1.msra.mxu0 0.0
        %273 = vmatprep.subr.mxu0 0.0
        %274 = vmatpush1.msra.mxu0 0.0
        %275 = vmatprep.subr.mxu0 0.0
        %276 = vmatpush1.msra.mxu0 0.0
        %277 = vmatprep.subr.mxu0 0.0
        %278 = vmatpush1.msra.mxu0 0.0
        %279 = vmatprep.subr.mxu0 0.0
        %280 = vmatpush1.msra.mxu0 0.0
        %281 = vmatprep.subr.mxu0 0.0
        %282 = vmatpush1.msra.mxu0 0.0
        %283 = vmatprep.subr.mxu0 0.0
        %284 = vmatpush1.msra.mxu0 0.0
        %285 = vmatprep.subr.mxu0 0.0
        %286 = vmatpush1.msra.mxu0 0.0
        %287 = vmatprep.subr.mxu0 0.0
        %288 = vmatpush1.msra.mxu0 0.0
        %289 = vmatprep.subr.mxu0 0.0
        %290 = vmatpush1.msra.mxu0 0.0
        %291 = vmatprep.subr.mxu0 0.0
        %292 = vmatpush1.msra.mxu0 0.0
        %293 = vmatprep.subr.mxu0 0.0
        %294 = vmatpush1.msra.mxu0 0.0
        %295 = vmatprep.subr.mxu0 0.0
        %296 = vmatpush1.msra.mxu0 0.0
        %297 = vmatprep.subr.mxu0 0.0
        %298 = vmatpush1.msra.mxu0 0.0
        %299 = vmatprep.subr.mxu0 0.0
        %300 = vmatpush1.msra.mxu0 0.0
        %301 = vmatprep.subr.mxu0 0.0
        %302 = vmatpush1.msra.mxu0 0.0
        %303 = vmatprep.subr.mxu0 0.0
        %304 = vmatpush1.msra.mxu0 0.0
        %305 = vmatprep.mubr.f32.mxu0 0.0
        %306 = vmatmul.mubr.f32.gmra.mrb[0].mxu0 %v239
        %v307 = vpop.f32.mrb[0].mxu0
        %v308 = vadd.f32 %v235, %v307
        %v309 = vpop.f32.mrb[0].mxu0
        %310 = vdwg.mxu0
        %311 = vst.msk [vmem:[%s224] sm:$0xff] %vm237, %v308
        %s312 = sand.u32 %s120, 1
        %s313 = scalar_lea.sflag [#allocation4], %s312
        %s314 = sand.u32 %s120, 1
        %s315 = smul.addr %s314, 8
        %s316 = scalar_lea.vmem [#allocation7], %s315
        // Predicated region
        $region41: #{tpu_custom_call.1} parent=31 // pred_check
          %p317 = pneg %p130
        $region42: #{tpu_custom_call.1} parent=31 // pred_check_branch
          %319 = sbr.rel (%p317) target = $region44
        $region43: #{tpu_custom_call.1} parent=31 // pred_region
          %s321 = ssub.s32 128, 128
          %322 = vsyncadd %s313, %s321
          %s323 = sadd.s32 %s27, %s26
          %s324 = smul.addr %s323, 128
          %s325 = scalar_lea.hbm %s3, %s324
          %s327 = sshll.u32 %s316, 4
          %s328 = int_to_ptr.vmem [resolvable:$true] %s327
          %330 = dma.vmem_to_hbm [thread:$0]  %s328, 128, %s325, %s313
        $region44: #{tpu_custom_call.1} parent=31 // pred_fallthru
          _
      $region32: #{tpu_custom_call.1} parent=5 // pred_fallthru
        _
      %p331 = scmp.le.s32.totalorder 2, %s16
      // Predicated region
      $region45: #{tpu_custom_call.1} parent=5 // pred_check
        %p332 = pneg %p331
      $region46: #{tpu_custom_call.1} parent=5 // pred_check_branch
        %334 = sbr.rel (%p332) target = $region48
      $region47: #{tpu_custom_call.1} parent=5 // pred_region
        %s335 = ssub.s32 %s16, 2
        // Predicated region
        $region49: #{tpu_custom_call.1} parent=47 // pred_check
          %p336 = pneg %p136
        $region50: #{tpu_custom_call.1} parent=47 // pred_check_branch
          %338 = sbr.rel (%p336) target = $region52
        $region51: #{tpu_custom_call.1} parent=47 // pred_region
          %s339 = sand.u32 %s121, 1
          %s340 = scalar_lea.sflag [#allocation4], %s339
          %s341 = sand.u32 %s121, 1
          %s342 = smul.addr %s341, 8
          %s343 = scalar_lea.vmem [#allocation7], %s342
          %344 = dma.done %s340, 128
        $region52: #{tpu_custom_call.1} parent=47 // pred_fallthru
          _
      $region48: #{tpu_custom_call.1} parent=5 // pred_fallthru
        _
    $region6: #{tpu_custom_call.1} parent=1 // loop_footer
      %s20 = sadd.s32 1, %s16
    $region7: #{tpu_custom_call.1} parent=1 // loop_footer_branch
      %15 = sbr.rel target = $region3
    $region8: #{tpu_custom_call.1} parent=1 // loop_exit
      _
    %345 = vsyncpa [#allocation3], 1
    %s346 = scalar_lea.sflag [#allocation3], 1
    %347 = vsyncpa %s346, 1
    %348 = vsyncpa [#allocation6], 1
    %349 = vsyncpa [#allocation4], 1
    %s350 = scalar_lea.sflag [#allocation4], 1
    %351 = vsyncpa %s350, 1

</llo_original>
